<compile_context>
chip_gen: v7x
topology: tpu7x:2x2x1
jax: 0.10.0
libtpu: 0.0.40
codegen_flags: <defaults>
</compile_context>

<pallas_src>
import math

import jax
import jax.numpy as jnp
from jax.experimental import pallas as pl
from jax.experimental.pallas import tpu as pltpu


def linreg_kernel(params_ref, x_ref, o_ref):
    # params_ref: SMEM (2,) f32 -> [weight, bias]; x_ref/o_ref: (tm, cols) tiles.
    w = params_ref[0]
    b = params_ref[1]
    o_ref[...] = (x_ref[...] * w + b).astype(o_ref.dtype)


def _default_block_bytes():
    # ~4 MiB blocks are the streaming sweet spot on v6e/v7x; 2 MiB is plenty on
    # v5e (per-step time ~5 us already dwarfs the ~0.35 us pipeline overhead).
    try:
        kind = jax.devices()[0].device_kind.lower()
    except Exception:
        kind = ""
    if "v5 lite" in kind or "v5e" in kind:
        return 2 << 20
    return 4 << 20


def linear_regression_forward(x, weights, bias, *, lane_width=1024, block_bytes=None):
    """y = weights * x + bias (scalar params broadcast over x), any x shape."""
    orig_shape = x.shape
    out_dtype = jnp.result_type(x.dtype, jnp.asarray(weights).dtype,
                                jnp.asarray(bias).dtype)

    x_arr = x.reshape(1) if x.ndim == 0 else x
    total = math.prod(x_arr.shape)

    # ---- Pick a lane-dense 2-D view of x (copy-free whenever possible). ----
    ragged = False
    if total % lane_width == 0:
        cols = lane_width
        x2d = x_arr.reshape(total // lane_width, lane_width)      # metadata only
    elif x_arr.ndim >= 2 and x_arr.shape[-1] % 128 == 0:
        cols = x_arr.shape[-1]
        x2d = x_arr.reshape(-1, cols)                             # metadata only
    else:
        # Truly ragged: pad the flat view by <= lane_width - 1 elements.
        # TODO(synk): this path still costs one pad pass + one slice pass of HBM
        # traffic; an in-kernel masked-tail variant could remove it.
        ragged = True
        cols = lane_width
        pad = (-total) % lane_width
        flat = jnp.pad(x_arr.reshape(-1), (0, pad))
        x2d = flat.reshape(-1, cols)

    rows = x2d.shape[0]
    in_itemsize = x2d.dtype.itemsize
    out_itemsize = jnp.dtype(out_dtype).itemsize
    # Native packed-tile sublane count for the narrowest dtype involved.
    sublane = 32 // min(in_itemsize, out_itemsize)

    # ---- Pick tm (block rows). ----
    if block_bytes is None:
        block_bytes = _default_block_bytes()
    if rows < sublane:
        tm = rows                                   # block dim == full array dim
    else:
        tm_cap = (rows // sublane) * sublane
        if rows >= 2 * sublane:
            # Ensure >= 2 grid steps so both v7x TensorCores get work.
            tm_cap = min(tm_cap, max(sublane, ((rows // 2) // sublane) * sublane))
        budget_rows = max(
            sublane, (block_bytes // (cols * in_itemsize)) // sublane * sublane)
        tm = min(budget_rows, tm_cap)
    grid = (pl.cdiv(rows, tm),)

    # x + y blocks, double-buffered, plus headroom.
    vmem_limit = 2 * tm * cols * (in_itemsize + out_itemsize) + (4 << 20)

    params = jnp.concatenate(
        [jnp.asarray(weights, jnp.float32).reshape(-1),
         jnp.asarray(bias, jnp.float32).reshape(-1)])

    out2d = pl.pallas_call(
        linreg_kernel,
        out_shape=jax.ShapeDtypeStruct((rows, cols), out_dtype),
        grid_spec=pltpu.PrefetchScalarGridSpec(
            num_scalar_prefetch=0,
            grid=grid,
            in_specs=[
                pl.BlockSpec(memory_space=pltpu.SMEM),          # [weight, bias]
                pl.BlockSpec((tm, cols), lambda i: (i, 0)),     # x tile
            ],
            out_specs=pl.BlockSpec((tm, cols), lambda i: (i, 0)),
        ),
        compiler_params=pltpu.CompilerParams(
            dimension_semantics=("parallel",),
            vmem_limit_bytes=vmem_limit,
        ),
    )(params, x2d)

    if ragged:
        return out2d.reshape(-1)[:total].reshape(orig_shape)
    return out2d.reshape(orig_shape)


if __name__ == "__main__":
    key = jax.random.PRNGKey(0)
    kw, kb, kx1, kx2, kx3, kx4 = jax.random.split(key, 6)

    # nn.Parameter(torch.randn(1)) analogues.
    weights = jax.random.normal(kw, (1,), dtype=jnp.float32)
    bias = jax.random.normal(kb, (1,), dtype=jnp.float32)

    def ref(xx):
        return weights[0] * xx + bias[0]

    # Aligned input (copy-free fast path, total % 1024 == 0, grid of 2).
    x1 = jax.random.normal(kx1, (256, 128), dtype=jnp.float32)
    y1 = jax.block_until_ready(linear_regression_forward(x1, weights, bias))
    assert y1.shape == x1.shape and y1.dtype == jnp.float32
    assert jnp.allclose(y1, ref(x1), atol=1e-6, rtol=1e-6)

    # Partial last block (rows = 17, tm = 8 -> grid = 3 with a 1-row tail).
    x2 = jax.random.normal(kx2, (136, 128), dtype=jnp.float32)
    y2 = jax.block_until_ready(linear_regression_forward(x2, weights, bias))
    assert y2.shape == x2.shape and y2.dtype == jnp.float32
    assert jnp.allclose(y2, ref(x2), atol=1e-6, rtol=1e-6)

    # Ragged / non-aligned input exercises the padded fallback path.
    x3 = jax.random.normal(kx3, (5, 37), dtype=jnp.float32)
    y3 = jax.block_until_ready(linear_regression_forward(x3, weights, bias))
    assert y3.shape == x3.shape and y3.dtype == jnp.float32
    assert jnp.allclose(y3, ref(x3), atol=1e-6, rtol=1e-6)

    # bf16 input: output promotes to float32 (PyTorch type promotion).
    x4 = jax.random.normal(kx4, (64, 128), dtype=jnp.bfloat16)
    y4 = jax.block_until_ready(linear_regression_forward(x4, weights, bias))
    assert y4.shape == x4.shape and y4.dtype == jnp.float32
    assert jnp.allclose(y4, ref(x4.astype(jnp.float32)), atol=1e-5, rtol=1e-5)

    print("KERNEL_OK")
</pallas_src>

<mosaic_0001>
module attributes {stable_mosaic.version = 11 : i64} {
  func.func @linreg_kernel(%arg0: i32, %arg1: memref<2xf32, #tpu.memory_space<smem>>, %arg2: memref<16x1024xf32, #tpu.memory_space<vmem>>, %arg3: memref<16x1024xf32, #tpu.memory_space<vmem>>) attributes {dimension_semantics = [#tpu.dimension_semantics<parallel>], iteration_bounds = array<i64: 2>, scalar_prefetch = 0 : i64, scratch_operands = 0 : i64, tpu.core_type = #tpu.core_type<tc>, window_params = [{transform_indices = @transform_0, window_bounds = array<i64: 2>}, {transform_indices = @transform_1, window_bounds = array<i64: 16, 1024>}, {transform_indices = @transform_2, window_bounds = array<i64: 16, 1024>}]} {
    %c0 = arith.constant 0 : index
    %0 = memref.load %arg1[%c0] : memref<2xf32, #tpu.memory_space<smem>>
    %c1 = arith.constant 1 : index
    %1 = memref.load %arg1[%c1] : memref<2xf32, #tpu.memory_space<smem>>
    %c0_0 = arith.constant 0 : index
    %c0_1 = arith.constant 0 : index
    %2 = vector.load %arg2[%c0_0, %c0_1] : memref<16x1024xf32, #tpu.memory_space<vmem>>, vector<16x1024xf32>
    %3 = vector.broadcast %0 : f32 to vector<16x1024xf32>
    %4 = arith.mulf %2, %3 : vector<16x1024xf32>
    %5 = vector.broadcast %1 : f32 to vector<16x1024xf32>
    %6 = arith.addf %4, %5 : vector<16x1024xf32>
    %c0_2 = arith.constant 0 : index
    %c0_3 = arith.constant 0 : index
    %7 = vector.load %arg3[%c0_2, %c0_3] : memref<16x1024xf32, #tpu.memory_space<vmem>>, vector<16x1024xf32>
    tpu.vector_store %arg3[%c0_2, %c0_3], %6 {strides = array<i32>} : memref<16x1024xf32, #tpu.memory_space<vmem>>, vector<16x1024xf32>,
    return
  }
  func.func @transform_0(%arg0: i32) -> i32 {
    %c0_i32 = arith.constant 0 : i32
    %c0_i32_0 = arith.constant 0 : i32
    return %c0_i32 : i32
  }
  func.func @transform_1(%arg0: i32) -> (i32, i32) {
    %c0_i32 = arith.constant 0 : i32
    %c0_i32_0 = arith.constant 0 : i32
    return %arg0, %c0_i32 : i32, i32
  }
  func.func @transform_2(%arg0: i32) -> (i32, i32) {
    %c0_i32 = arith.constant 0 : i32
    %c0_i32_0 = arith.constant 0 : i32
    return %arg0, %c0_i32 : i32, i32
  }
}

</mosaic_0001>

<llo_original>
// kernel: tpu_custom_call.1
$region0: #{tpu_custom_call.1}
  #allocation0 [shape = 'u32[]', space=smem, size = 0x4, offset = 0x4, fixed_abs, tag = 'smem constant byte address 0x4 - core index']
  #allocation1 [shape = 'u32[144,128]{1,0:T(1,128)}', space=vmem, size = 0x12000, scoped, tag = 'internal scratch']
  %s0 = inlined_call_operand.hbm [shape: f32[2], index: 0, kind: input, shape index: {}]
  %s1 = inlined_call_operand.hbm [shape: f32[32,1024], index: 1, kind: input, shape index: {}]
  %s2 = inlined_call_operand.hbm [shape: f32[32,1024], index: 2, kind: output, shape index: {}]
  %s3 = sld [smem:[#allocation0]]
  $region49: #{tpu_custom_call.1} parent=0
    _
  %s5 = ssub.s32 1, %s3
  %s6 = scalar_select 0, %s5, %s3
  $region1: #{tpu_custom_call.1} parent=0
    #allocation2 [shape = 'u8[512]{0}', space=smem, size = 0x200, scoped, tag = 'input window, operand 0, single buffered']
    #allocation3 [shape = 's32[2]{0}', space=sflag, size = 0x8, scoped, tag = 'scoped memory for tpu_custom_call.1']
    #allocation4 [shape = 's32[2]{0}', space=sflag, size = 0x8, scoped, tag = 'scoped memory for tpu_custom_call.1']
    #allocation5 [shape = 's32[2]{0}', space=sflag, size = 0x8, scoped, tag = 'scoped memory for tpu_custom_call.1']
    #allocation6 [shape = 'u8[131072]{0}', space=vmem, size = 0x20000, scoped, tag = 'input window, operand 1']
    #allocation7 [shape = 'u8[131072]{0}', space=vmem, size = 0x20000, scoped, tag = 'output window, operand 0']
    %7 = vsyncpa [#allocation5], 0
    %8 = vsyncpa [#allocation3], 0
    %s9 = scalar_lea.sflag [#allocation3], 1
    %10 = vsyncpa %s9, 0
    %11 = vsyncpa [#allocation4], 0
    %s12 = scalar_lea.sflag [#allocation4], 1
    %13 = vsyncpa %s12, 0
    loop: start=0, step=1, limit=4
    $region2: #{tpu_custom_call.1} parent=1 // loop_pre_header
      _
    $region3: #{tpu_custom_call.1} parent=1 // loop_header
      %s15 = sphi 0, %s19
      %p16 = scmp.ge.s32.totalorder %s15, 4
      %s23 = sphi 0, %s23
      %s25 = sphi 0, %s23
      %s26 = sphi 0, %s25
      %s40 = sphi 0, %s26
      %s46 = sphi 0, %s48
      %s49 = sphi 0, %s46
      %s50 = sphi 0, %s49
      %s66 = sphi 0, %s50
      %s72 = sphi 0, %s74
      %s75 = sphi 0, %s72
      %s76 = sphi 0, %s75
      %s92 = sphi 0, %s76
    $region4: #{tpu_custom_call.1} parent=1 // loop_header_branch
      %18 = sbr.rel (%p16) target = $region8
    $region5: #{tpu_custom_call.1} parent=1 // loop_body
      %s20 = ssub.s32 %s15, 1
      %s21 = ssub.s32 %s15, 2
      %s22 = sadd.s32 %s15, 1
      %s24 = sadd.s32 %s23, 1
      %p27 = scmp.eq.s32.totalorder %s15, 1
      %p28 = scmp.ne.s32.totalorder %s23, %s25
      %p29 = scmp.eq.s32.totalorder %s15, 0
      %p30 = por %p28, %p29
      %p31 = scmp.ne.s32.totalorder %s23, %s25
      %p32 = scmp.eq.s32.totalorder %s20, 1
      %p33 = por %p31, %p32
      %p34 = scmp.ne.s32.totalorder %s25, %s26
      %p35 = scmp.eq.s32.totalorder %s20, 0
      %p36 = por %p34, %p35
      %p37 = scmp.ne.s32.totalorder %s25, %s26
      %p38 = scmp.eq.s32.totalorder %s21, 1
      %p39 = por %p37, %p38
      %p41 = scmp.ne.s32.totalorder %s26, %s40
      %p42 = scmp.eq.s32.totalorder %s21, 0
      %p43 = por %p41, %p42
      %s44 = ssub.s32 %s15, %s22
      %p45 = scmp.eq.s32.totalorder %s44, 0
      %s47 = sadd.s32 %s46, 1
      %s48 = scalar_select %p45, %s46, %s47
      %p51 = pneg %p45
      %p52 = scmp.eq.s32.totalorder %s15, 1
      %p53 = por %p51, %p52
      %p54 = scmp.ne.s32.totalorder %s46, %s49
      %p55 = scmp.eq.s32.totalorder %s15, 0
      %p56 = por %p54, %p55
      %p57 = scmp.ne.s32.totalorder %s46, %s49
      %p58 = scmp.eq.s32.totalorder %s20, 1
      %p59 = por %p57, %p58
      %p60 = scmp.ne.s32.totalorder %s49, %s50
      %p61 = scmp.eq.s32.totalorder %s20, 0
      %p62 = por %p60, %p61
      %p63 = scmp.ne.s32.totalorder %s49, %s50
      %p64 = scmp.eq.s32.totalorder %s21, 1
      %p65 = por %p63, %p64
      %p67 = scmp.ne.s32.totalorder %s50, %s66
      %p68 = scmp.eq.s32.totalorder %s21, 0
      %p69 = por %p67, %p68
      %s70 = ssub.s32 %s15, %s22
      %p71 = scmp.eq.s32.totalorder %s70, 0
      %s73 = sadd.s32 %s72, 1
      %s74 = scalar_select %p71, %s72, %s73
      %p77 = pneg %p71
      %p78 = scmp.eq.s32.totalorder %s15, 1
      %p79 = por %p77, %p78
      %p80 = scmp.ne.s32.totalorder %s72, %s75
      %p81 = scmp.eq.s32.totalorder %s15, 0
      %p82 = por %p80, %p81
      %p83 = scmp.ne.s32.totalorder %s72, %s75
      %p84 = scmp.eq.s32.totalorder %s20, 1
      %p85 = por %p83, %p84
      %p86 = scmp.ne.s32.totalorder %s75, %s76
      %p87 = scmp.eq.s32.totalorder %s20, 0
      %p88 = por %p86, %p87
      %p89 = scmp.ne.s32.totalorder %s75, %s76
      %p90 = scmp.eq.s32.totalorder %s21, 1
      %p91 = por %p89, %p90
      %p93 = scmp.ne.s32.totalorder %s76, %s92
      %p94 = scmp.eq.s32.totalorder %s21, 0
      %p95 = por %p93, %p94
      %p96 = scmp.le.s32.totalorder 1, %s15
      %p97 = scmp.lt.s32.totalorder %s15, 3
      %p98 = pnand %p96, %p97
      %p99 = pneg %p98
      // Predicated region
      $region9: #{tpu_custom_call.1} parent=5 // pred_check
        _
      $region10: #{tpu_custom_call.1} parent=5 // pred_check_branch
        %101 = sbr.rel (%p98) target = $region12
      $region11: #{tpu_custom_call.1} parent=5 // pred_region
        %s102 = ssub.s32 %s15, 1
        // Predicated region
        $region13: #{tpu_custom_call.1} parent=11 // pred_check
          %p103 = pneg %p36
        $region14: #{tpu_custom_call.1} parent=11 // pred_check_branch
          %105 = sbr.rel (%p103) target = $region16
        $region15: #{tpu_custom_call.1} parent=11 // pred_region
          %s107 = ssub.s32 16, 16
          %108 = vsyncadd [#allocation5], %s107
          %111 = dma.hbm_to_smem %s0, 16, [#allocation2], [#allocation5]
        $region16: #{tpu_custom_call.1} parent=11 // pred_fallthru
          _
      $region12: #{tpu_custom_call.1} parent=5 // pred_fallthru
        _
      %p112 = scmp.lt.s32.totalorder %s15, 2
      // Predicated region
      $region17: #{tpu_custom_call.1} parent=5 // pred_check
        %p113 = pneg %p112
      $region18: #{tpu_custom_call.1} parent=5 // pred_check_branch
        %115 = sbr.rel (%p113) target = $region20
      $region19: #{tpu_custom_call.1} parent=5 // pred_region
        // Predicated region
        $region21: #{tpu_custom_call.1} parent=19 // pred_check
          %p116 = pneg %p56
        $region22: #{tpu_custom_call.1} parent=19 // pred_check_branch
          %118 = sbr.rel (%p116) target = $region24
        $region23: #{tpu_custom_call.1} parent=19 // pred_region
          %s119 = sand.u32 %s46, 1
          %s120 = scalar_lea.sflag [#allocation3], %s119
          %s121 = sand.u32 %s46, 1
          %s122 = smul.addr %s121, 128
          %s123 = scalar_lea.vmem [#allocation6], %s122
          %s124 = smul.u32 2, %s15
          %s126 = ssub.s32 2048, 2048
          %127 = vsyncadd %s120, %s126
          %s128 = smul.addr %s124, 8
          %s129 = smul.addr %s128, 128
          %s130 = scalar_lea.hbm %s1, %s129
          %s131 = sshll.u32 %s123, 4
          %s132 = int_to_ptr.vmem [resolvable:$true] %s131
          %137 = dma.hbm_to_vmem [thread:$0]  %s130, 2048, %s132, %s120, 1024, 1024, 64
        $region24: #{tpu_custom_call.1} parent=19 // pred_fallthru
          _
      $region20: #{tpu_custom_call.1} parent=5 // pred_fallthru
        _
      %p138 = scmp.le.s32.totalorder 1, %s15
      %p139 = scmp.lt.s32.totalorder %s15, 3
      %p140 = pnand %p138, %p139
      %p141 = pneg %p140
      // Predicated region
      $region25: #{tpu_custom_call.1} parent=5 // pred_check
        _
      $region26: #{tpu_custom_call.1} parent=5 // pred_check_branch
        %143 = sbr.rel (%p140) target = $region28
      $region27: #{tpu_custom_call.1} parent=5 // pred_region
        %s144 = ssub.s32 %s15, 1
        // Predicated region
        $region29: #{tpu_custom_call.1} parent=27 // pred_check
          %p145 = pneg %p36
        $region30: #{tpu_custom_call.1} parent=27 // pred_check_branch
          %147 = sbr.rel (%p145) target = $region32
        $region31: #{tpu_custom_call.1} parent=27 // pred_region
          %148 = dma.done [#allocation5], 16
        $region32: #{tpu_custom_call.1} parent=27 // pred_fallthru
          _
        %s149 = sand.u32 %s49, 1
        %s150 = scalar_lea.sflag [#allocation3], %s149
        %s151 = sand.u32 %s49, 1
        %s152 = smul.addr %s151, 128
        %s153 = scalar_lea.vmem [#allocation6], %s152
        // Predicated region
        $region33: #{tpu_custom_call.1} parent=27 // pred_check
          %p154 = pneg %p62
        $region34: #{tpu_custom_call.1} parent=27 // pred_check_branch
          %156 = sbr.rel (%p154) target = $region36
        $region35: #{tpu_custom_call.1} parent=27 // pred_region
          %157 = dma.done %s150, 2048
        $region36: #{tpu_custom_call.1} parent=27 // pred_fallthru
          _
        %158 = sfence
        %p159 = pneg %p36
        %p160 = pneg %p33
        %s161 = sand.u32 %s49, 1
        %s162 = scalar_lea.sflag [#allocation3], %s161
        %s163 = sand.u32 %s49, 1
        %s164 = smul.addr %s163, 128
        %s165 = scalar_lea.vmem [#allocation6], %s164
        %p166 = pneg %p62
        %p167 = pneg %p59
        %p168 = pneg %p88
        %p169 = pneg %p85
        %s170 = sand.u32 %s75, 1
        %s171 = scalar_lea.sflag [#allocation4], %s170
        %s172 = sand.u32 %s75, 1
        %s173 = smul.addr %s172, 128
        %s174 = scalar_lea.vmem [#allocation7], %s173
        %s175 = smul.u32 2, %s20
        %s176 = smul.u32 2, %s20
        %s177 = sld [smem:[#allocation2]]
        %s178 = sld [smem:[#allocation2 + $0x1]]
        %v179 = vld [vmem:[%s153] sm:$0xff]
        %v180 = vld [vmem:[%s153 + $0x8] sm:$0xff]
        %v181 = vld [vmem:[%s153 + $0x10] sm:$0xff]
        %v182 = vld [vmem:[%s153 + $0x18] sm:$0xff]
        %v183 = vld [vmem:[%s153 + $0x20] sm:$0xff]
        %v184 = vld [vmem:[%s153 + $0x28] sm:$0xff]
        %v185 = vld [vmem:[%s153 + $0x30] sm:$0xff]
        %v186 = vld [vmem:[%s153 + $0x38] sm:$0xff]
        %v187 = vld [vmem:[%s153 + $0x40] sm:$0xff]
        %v188 = vld [vmem:[%s153 + $0x48] sm:$0xff]
        %v189 = vld [vmem:[%s153 + $0x50] sm:$0xff]
        %v190 = vld [vmem:[%s153 + $0x58] sm:$0xff]
        %v191 = vld [vmem:[%s153 + $0x60] sm:$0xff]
        %v192 = vld [vmem:[%s153 + $0x68] sm:$0xff]
        %v193 = vld [vmem:[%s153 + $0x70] sm:$0xff]
        %v194 = vld [vmem:[%s153 + $0x78] sm:$0xff]
        %v195 = vstv %s177
        %v196 = vmul.f32 %v179, %v195
        %v197 = vmul.f32 %v180, %v195
        %v198 = vmul.f32 %v181, %v195
        %v199 = vmul.f32 %v182, %v195
        %v200 = vmul.f32 %v183, %v195
        %v201 = vmul.f32 %v184, %v195
        %v202 = vmul.f32 %v185, %v195
        %v203 = vmul.f32 %v186, %v195
        %v204 = vmul.f32 %v187, %v195
        %v205 = vmul.f32 %v188, %v195
        %v206 = vmul.f32 %v189, %v195
        %v207 = vmul.f32 %v190, %v195
        %v208 = vmul.f32 %v191, %v195
        %v209 = vmul.f32 %v192, %v195
        %v210 = vmul.f32 %v193, %v195
        %v211 = vmul.f32 %v194, %v195
        %v212 = vstv %s178
        %v213 = vadd.f32 %v196, %v212
        %v214 = vadd.f32 %v197, %v212
        %v215 = vadd.f32 %v198, %v212
        %v216 = vadd.f32 %v199, %v212
        %v217 = vadd.f32 %v200, %v212
        %v218 = vadd.f32 %v201, %v212
        %v219 = vadd.f32 %v202, %v212
        %v220 = vadd.f32 %v203, %v212
        %v221 = vadd.f32 %v204, %v212
        %v222 = vadd.f32 %v205, %v212
        %v223 = vadd.f32 %v206, %v212
        %v224 = vadd.f32 %v207, %v212
        %v225 = vadd.f32 %v208, %v212
        %v226 = vadd.f32 %v209, %v212
        %v227 = vadd.f32 %v210, %v212
        %v228 = vadd.f32 %v211, %v212
        %229 = vst [vmem:[%s174] sm:$0xff] %v213
        %230 = vst [vmem:[%s174 + $0x8] sm:$0xff] %v214
        %231 = vst [vmem:[%s174 + $0x10] sm:$0xff] %v215
        %232 = vst [vmem:[%s174 + $0x18] sm:$0xff] %v216
        %233 = vst [vmem:[%s174 + $0x20] sm:$0xff] %v217
        %234 = vst [vmem:[%s174 + $0x28] sm:$0xff] %v218
        %235 = vst [vmem:[%s174 + $0x30] sm:$0xff] %v219
        %236 = vst [vmem:[%s174 + $0x38] sm:$0xff] %v220
        %237 = vst [vmem:[%s174 + $0x40] sm:$0xff] %v221
        %238 = vst [vmem:[%s174 + $0x48] sm:$0xff] %v222
        %239 = vst [vmem:[%s174 + $0x50] sm:$0xff] %v223
        %240 = vst [vmem:[%s174 + $0x58] sm:$0xff] %v224
        %241 = vst [vmem:[%s174 + $0x60] sm:$0xff] %v225
        %242 = vst [vmem:[%s174 + $0x68] sm:$0xff] %v226
        %243 = vst [vmem:[%s174 + $0x70] sm:$0xff] %v227
        %244 = vst [vmem:[%s174 + $0x78] sm:$0xff] %v228
        %s245 = sand.u32 %s75, 1
        %s246 = scalar_lea.sflag [#allocation4], %s245
        %s247 = sand.u32 %s75, 1
        %s248 = smul.addr %s247, 128
        %s249 = scalar_lea.vmem [#allocation7], %s248
        // Predicated region
        $region37: #{tpu_custom_call.1} parent=27 // pred_check
          %p250 = pneg %p85
        $region38: #{tpu_custom_call.1} parent=27 // pred_check_branch
          %252 = sbr.rel (%p250) target = $region40
        $region39: #{tpu_custom_call.1} parent=27 // pred_region
          %s253 = smul.u32 2, %s20
          %s255 = ssub.s32 2048, 2048
          %256 = vsyncadd %s246, %s255
          %s257 = smul.addr %s253, 8
          %s258 = smul.addr %s257, 128
          %s259 = scalar_lea.hbm %s2, %s258
          %s260 = sshll.u32 %s249, 4
          %s261 = int_to_ptr.vmem [resolvable:$true] %s260
          %266 = dma.vmem_to_hbm [thread:$0]  %s261, 2048, %s259, %s246, 1024, 1024, 64
        $region40: #{tpu_custom_call.1} parent=27 // pred_fallthru
          _
      $region28: #{tpu_custom_call.1} parent=5 // pred_fallthru
        _
      %p267 = scmp.le.s32.totalorder 2, %s15
      // Predicated region
      $region41: #{tpu_custom_call.1} parent=5 // pred_check
        %p268 = pneg %p267
      $region42: #{tpu_custom_call.1} parent=5 // pred_check_branch
        %270 = sbr.rel (%p268) target = $region44
      $region43: #{tpu_custom_call.1} parent=5 // pred_region
        %s271 = ssub.s32 %s15, 2
        // Predicated region
        $region45: #{tpu_custom_call.1} parent=43 // pred_check
          %p272 = pneg %p91
        $region46: #{tpu_custom_call.1} parent=43 // pred_check_branch
          %274 = sbr.rel (%p272) target = $region48
        $region47: #{tpu_custom_call.1} parent=43 // pred_region
          %s275 = sand.u32 %s76, 1
          %s276 = scalar_lea.sflag [#allocation4], %s275
          %s277 = sand.u32 %s76, 1
          %s278 = smul.addr %s277, 128
          %s279 = scalar_lea.vmem [#allocation7], %s278
          %280 = dma.done %s276, 2048
        $region48: #{tpu_custom_call.1} parent=43 // pred_fallthru
          _
      $region44: #{tpu_custom_call.1} parent=5 // pred_fallthru
        _
    $region6: #{tpu_custom_call.1} parent=1 // loop_footer
      %s19 = sadd.s32 1, %s15
    $region7: #{tpu_custom_call.1} parent=1 // loop_footer_branch
      %14 = sbr.rel target = $region3
    $region8: #{tpu_custom_call.1} parent=1 // loop_exit
      _
    %281 = vsyncpa [#allocation3], 1
    %s282 = scalar_lea.sflag [#allocation3], 1
    %283 = vsyncpa %s282, 1
    %284 = vsyncpa [#allocation4], 1
    %s285 = scalar_lea.sflag [#allocation4], 1
    %286 = vsyncpa %s285, 1
    %287 = vsyncpa [#allocation5], 1
    %s288 = scalar_lea.sflag [#allocation5], 1
    %289 = vsyncpa %s288, 1

</llo_original>
